<compile_context>
chip_gen: v7x
topology: tpu7x:2x2x1
jax: 0.10.0
libtpu: 0.0.40
codegen_flags: <defaults>
</compile_context>

<pallas_src>
import functools

import jax
import jax.numpy as jnp
from jax.experimental import pallas as pl
from jax.experimental.pallas import tpu as pltpu


def _round_up(x, m):
    return (x + m - 1) // m * m


# ----------------------------------------------------------------------------
# Pallas kernel: reparameterize + decoder_a + decoder_x, two exact-width outputs
# ----------------------------------------------------------------------------
def _explainer_kernel(*refs, beta, training):
    n_stream = 3 if training else 1
    stream = refs[:n_stream]
    (w1a_ref, b1a_ref, w2a_ref, b2a_ref,
     w1x_ref, b1x_ref, w2x_ref, b2x_ref,
     oa_ref, ox_ref) = refs[n_stream:]

    mu = stream[0][...].astype(jnp.float32)
    if training:
        logvar = stream[1][...].astype(jnp.float32)
        eps = stream[2][...].astype(jnp.float32)
        z = eps * jnp.exp((0.5 * beta) * logvar) + mu      # eps*std + mu
    else:
        z = mu                                             # eval: z = mu

    zb = z.astype(w1a_ref.dtype)                           # bf16 MXU operands

    # decoder_a: sigmoid(relu(z @ w1a + b1a) @ w2a + b2a)
    ha = jnp.dot(zb, w1a_ref[...], preferred_element_type=jnp.float32) + b1a_ref[...]
    ha = jnp.maximum(ha, 0.0)
    oa = jnp.dot(ha.astype(w2a_ref.dtype), w2a_ref[...],
                 preferred_element_type=jnp.float32) + b2a_ref[...]
    oa_ref[...] = jax.nn.sigmoid(oa).astype(oa_ref.dtype)

    # decoder_x: sigmoid(relu(z @ w1x + b1x) @ w2x + b2x)
    hx = jnp.dot(zb, w1x_ref[...], preferred_element_type=jnp.float32) + b1x_ref[...]
    hx = jnp.maximum(hx, 0.0)
    ox = jnp.dot(hx.astype(w2x_ref.dtype), w2x_ref[...],
                 preferred_element_type=jnp.float32) + b2x_ref[...]
    ox_ref[...] = jax.nn.sigmoid(ox).astype(ox_ref.dtype)


# ----------------------------------------------------------------------------
# Weight prep (do this ONCE; don't re-cast per forward call)
# ----------------------------------------------------------------------------
def prepare_decoder_params(dec, matmul_dtype=jnp.bfloat16):
    return dict(
        w1=dec["w1"].astype(matmul_dtype), b1=dec["b1"].astype(jnp.float32),
        w2=dec["w2"].astype(matmul_dtype), b2=dec["b2"].astype(jnp.float32))


# ----------------------------------------------------------------------------
# Wrapper: tile over N (row-parallel), call the kernel, return (recons_a, recons_x)
# ----------------------------------------------------------------------------
def explainer_decode_pallas(mu, logvar, dec_a, dec_x, *, beta=1.0, training=True,
                            eps=None, rng_key=None, tile_n=1024):
    """Reparameterize + both decoders in one pallas_call.

    mu, logvar : [N, 2*z_dim] float32
    dec_a/dec_x: dicts with w1 [2z,2z], b1 [1,2z], w2 [2z,out], b2 [1,out]
                 (pass through prepare_decoder_params once for bf16 matmul operands)
    eps        : optional [N, 2*z_dim] noise; drawn from rng_key when training
    returns (recons_a [N, a_out], recons_x [N, x_out]) in float32
    """
    N, D = mu.shape
    a_out = dec_a["w2"].shape[1]
    x_out = dec_x["w2"].shape[1]

    if training and eps is None:
        # torch.randn_like equivalent; hardware PRNG intentionally not used (it does
        # not lower in interpret mode).
        if rng_key is None:
            rng_key = jax.random.PRNGKey(0)
        eps = jax.random.normal(rng_key, mu.shape, jnp.float32)

    # Big row tiles (HBM-bound kernel), but keep >=2 grid steps so both v7x TCs work,
    # and keep the row block a multiple of 8.
    tile_n = max(8, min(tile_n, _round_up(pl.cdiv(N, 2), 8), _round_up(N, 8)))
    n_tiles = pl.cdiv(N, tile_n)            # ragged last block handled by Pallas

    streams = [mu] + ([logvar, eps] if training else [])
    weights = [dec_a["w1"], dec_a["b1"], dec_a["w2"], dec_a["b2"],
               dec_x["w1"], dec_x["b1"], dec_x["w2"], dec_x["b2"]]

    def row_spec(cols):
        return pl.BlockSpec((tile_n, cols), lambda i: (i, 0))

    def const_spec(arr):
        return pl.BlockSpec(arr.shape, lambda i: (0, 0))   # VMEM-resident across steps

    in_specs = [row_spec(a.shape[1]) for a in streams] + [const_spec(w) for w in weights]
    out_specs = [pl.BlockSpec((tile_n, a_out), lambda i: (i, 0)),
                 pl.BlockSpec((tile_n, x_out), lambda i: (i, 0))]
    out_shape = (jax.ShapeDtypeStruct((N, a_out), jnp.float32),
                 jax.ShapeDtypeStruct((N, x_out), jnp.float32))

    # advisory cost estimate (kernel is memory-bound)
    flops = int(2 * N * (D * D + D * a_out + D * D + D * x_out))
    transcendentals = int(N * (a_out + x_out + (D if training else 0)))
    bytes_accessed = int(sum(int(a.size) * a.dtype.itemsize for a in streams + weights)
                         + N * (a_out + x_out) * 4)

    recons_a, recons_x = pl.pallas_call(
        functools.partial(_explainer_kernel, beta=float(beta), training=training),
        out_shape=out_shape,
        grid_spec=pltpu.PrefetchScalarGridSpec(
            num_scalar_prefetch=0,
            grid=(n_tiles,),
            in_specs=in_specs,
            out_specs=out_specs,
        ),
        compiler_params=pltpu.CompilerParams(
            dimension_semantics=("parallel",),       # row-parallel -> both TCs on v7x
            vmem_limit_bytes=32 * 1024 * 1024,       # fits scoped VMEM on v5e/v6e/v7x
        ),
        cost_estimate=pl.CostEstimate(
            flops=flops, transcendentals=transcendentals, bytes_accessed=bytes_accessed),
    )(*streams, *weights)

    return recons_a, recons_x


# ----------------------------------------------------------------------------
# Glue: deterministic parameter init + synthetic encoder (plain JAX)
# ----------------------------------------------------------------------------
def _linear_init(key, fan_in, fan_out):
    # mimics torch.nn.Linear default init: U(-1/sqrt(fan_in), 1/sqrt(fan_in))
    kw, kb = jax.random.split(key)
    bound = 1.0 / jnp.sqrt(fan_in)
    w = jax.random.uniform(kw, (fan_in, fan_out), jnp.float32, -bound, bound)
    b = jax.random.uniform(kb, (1, fan_out), jnp.float32, -bound, bound)
    return w, b


def make_decoder_params(key, z_dim, out_size):
    k1, k2 = jax.random.split(key)
    w1, b1 = _linear_init(k1, 2 * z_dim, 2 * z_dim)
    w2, b2 = _linear_init(k2, 2 * z_dim, out_size)
    return dict(w1=w1, b1=b1, w2=w2, b2=b2)


def synthetic_encoder(params, x, edge_index, edge_weight, y_target):
    # TODO(synk): the real encoder is injected externally into Explainer; this is a
    # deterministic dense message-passing stand-in (plain-JAX glue, not the hot path).
    N = x.shape[0]
    A = jnp.zeros((N, N), x.dtype).at[edge_index[0], edge_index[1]].set(edge_weight)
    h = jnp.concatenate([A @ x, y_target[:, None].astype(x.dtype)], axis=-1)
    h = jax.nn.relu(h @ params["We"] + params["be"])
    mu = h @ params["Wmu"] + params["bmu"]
    logvar = h @ params["Wlv"] + params["blv"]
    return mu, logvar


def explainer_forward(enc_params, dec_a, dec_x, x, edge_index, edge_weight,
                      y_target, *, beta=1.0, training=True, rng_key=None, eps=None):
    mu, logvar = synthetic_encoder(enc_params, x, edge_index, edge_weight, y_target)
    recons_a, recons_x = explainer_decode_pallas(
        mu, logvar, dec_a, dec_x, beta=beta, training=training, eps=eps, rng_key=rng_key)
    # The PyTorch forward has no explicit return; expose the computed tensors.
    return recons_a, recons_x, mu, logvar


# pure-JAX reference of the decoder math (same bf16 matmul operands as the kernel)
def _decode_ref(z, dec_a, dec_x, matmul_dtype=jnp.bfloat16):
    def dec(p):
        h = jnp.dot(z.astype(matmul_dtype), p["w1"].astype(matmul_dtype),
                    preferred_element_type=jnp.float32) + p["b1"]
        h = jnp.maximum(h, 0.0)
        o = jnp.dot(h.astype(matmul_dtype), p["w2"].astype(matmul_dtype),
                    preferred_element_type=jnp.float32) + p["b2"]
        return jax.nn.sigmoid(o)
    return dec(dec_a), dec(dec_x)


if __name__ == "__main__":
    key = jax.random.PRNGKey(0)
    k_enc, k_da, k_dx, k_x, k_ew, k_eps, k_prng = jax.random.split(key, 7)

    # small but non-trivial graph shapes (exercises the N-grid: 256 rows, 2 row tiles)
    N, F, E = 256, 16, 512          # nodes, node features, edges
    z_dim = 16                      # decoders operate on 2*z_dim = 32
    a_out_size, x_out_size = 8, 16

    # synthetic encoder params
    ke1, ke2, ke3 = jax.random.split(k_enc, 3)
    We, be = _linear_init(ke1, F + 1, 2 * z_dim)
    Wmu, bmu = _linear_init(ke2, 2 * z_dim, 2 * z_dim)
    Wlv, blv = _linear_init(ke3, 2 * z_dim, 2 * z_dim)
    enc_params = dict(We=We, be=be, Wmu=Wmu, bmu=bmu, Wlv=Wlv, blv=blv)

    dec_a_raw = make_decoder_params(k_da, z_dim, a_out_size)
    dec_x_raw = make_decoder_params(k_dx, z_dim, x_out_size)
    dec_a = prepare_decoder_params(dec_a_raw)    # one-time bf16 weight prep
    dec_x = prepare_decoder_params(dec_x_raw)

    # inputs
    x = jax.random.normal(k_x, (N, F), jnp.float32)
    src = jnp.arange(E, dtype=jnp.int32) % N
    dst = (jnp.arange(E, dtype=jnp.int32) * 7 + 3) % N
    edge_index = jnp.stack([src, dst], axis=0)
    edge_weight = jax.random.uniform(k_ew, (E,), jnp.float32)
    y_target = jnp.arange(N, dtype=jnp.int32) % 2

    mu, logvar = synthetic_encoder(enc_params, x, edge_index, edge_weight, y_target)

    # 1) eval path (z = mu): compare against pure-JAX reference
    ra_e, rx_e = explainer_decode_pallas(mu, logvar, dec_a, dec_x,
                                         beta=1.0, training=False)
    jax.block_until_ready((ra_e, rx_e))
    ra_ref, rx_ref = _decode_ref(mu, dec_a_raw, dec_x_raw)
    assert jnp.allclose(ra_e, ra_ref, atol=5e-3), "eval recons_a mismatch"
    assert jnp.allclose(rx_e, rx_ref, atol=5e-3), "eval recons_x mismatch"

    # 2) training path with externally supplied eps: exact check of reparameterize math
    beta = 0.7
    eps = jax.random.normal(k_eps, mu.shape, jnp.float32)
    ra_t, rx_t = explainer_decode_pallas(mu, logvar, dec_a, dec_x,
                                         beta=beta, training=True, eps=eps)
    jax.block_until_ready((ra_t, rx_t))
    z_ref = eps * jnp.exp(0.5 * beta * logvar) + mu
    ra_ref, rx_ref = _decode_ref(z_ref, dec_a_raw, dec_x_raw)
    assert jnp.allclose(ra_t, ra_ref, atol=5e-3), "train recons_a mismatch"
    assert jnp.allclose(rx_t, rx_ref, atol=5e-3), "train recons_x mismatch"

    # 3) ragged row count (N=200 -> tile_n=104, last block partial): eval path check
    Nr = 200
    ra_r, rx_r = explainer_decode_pallas(mu[:Nr], logvar[:Nr], dec_a, dec_x,
                                         beta=1.0, training=False)
    jax.block_until_ready((ra_r, rx_r))
    ra_ref_r, rx_ref_r = _decode_ref(mu[:Nr], dec_a_raw, dec_x_raw)
    assert ra_r.shape == (Nr, a_out_size) and rx_r.shape == (Nr, x_out_size)
    assert jnp.allclose(ra_r, ra_ref_r, atol=5e-3), "ragged recons_a mismatch"
    assert jnp.allclose(rx_r, rx_ref_r, atol=5e-3), "ragged recons_x mismatch"

    # 4) full forward, default training path (eps drawn inside the wrapper from a key)
    ra_p, rx_p, mu_o, lv_o = explainer_forward(
        enc_params, dec_a, dec_x, x, edge_index, edge_weight, y_target,
        beta=1.0, training=True, rng_key=k_prng)
    jax.block_until_ready((ra_p, rx_p))
    assert ra_p.shape == (N, a_out_size) and rx_p.shape == (N, x_out_size)
    for t in (ra_p, rx_p):
        assert bool(jnp.all(jnp.isfinite(t))), "training path produced non-finite"
        assert bool(jnp.all((t >= 0.0) & (t <= 1.0))), "sigmoid output out of range"

    print("KERNEL_OK")
</pallas_src>

<mosaic_0001>
module attributes {stable_mosaic.version = 11 : i64} {
  func.func @_explainer_kernel(%arg0: i32, %arg1: memref<128x32xf32, #tpu.memory_space<vmem>>, %arg2: memref<32x32xbf16, #tpu.memory_space<vmem>>, %arg3: memref<1x32xf32, #tpu.memory_space<vmem>>, %arg4: memref<32x8xbf16, #tpu.memory_space<vmem>>, %arg5: memref<1x8xf32, #tpu.memory_space<vmem>>, %arg6: memref<32x32xbf16, #tpu.memory_space<vmem>>, %arg7: memref<1x32xf32, #tpu.memory_space<vmem>>, %arg8: memref<32x16xbf16, #tpu.memory_space<vmem>>, %arg9: memref<1x16xf32, #tpu.memory_space<vmem>>, %arg10: memref<128x8xf32, #tpu.memory_space<vmem>>, %arg11: memref<128x16xf32, #tpu.memory_space<vmem>>) attributes {dimension_semantics = [#tpu.dimension_semantics<parallel>], iteration_bounds = array<i64: 2>, scalar_prefetch = 0 : i64, scratch_operands = 0 : i64, tpu.core_type = #tpu.core_type<tc>, window_params = [{transform_indices = @transform_0, window_bounds = array<i64: 128, 32>}, {pipeline_mode = #tpu.pipeline_mode<synchronous>, transform_indices = @transform_1, window_bounds = array<i64: 32, 32>}, {pipeline_mode = #tpu.pipeline_mode<synchronous>, transform_indices = @transform_2, window_bounds = array<i64: 1, 32>}, {pipeline_mode = #tpu.pipeline_mode<synchronous>, transform_indices = @transform_3, window_bounds = array<i64: 32, 8>}, {pipeline_mode = #tpu.pipeline_mode<synchronous>, transform_indices = @transform_4, window_bounds = array<i64: 1, 8>}, {pipeline_mode = #tpu.pipeline_mode<synchronous>, transform_indices = @transform_5, window_bounds = array<i64: 32, 32>}, {pipeline_mode = #tpu.pipeline_mode<synchronous>, transform_indices = @transform_6, window_bounds = array<i64: 1, 32>}, {pipeline_mode = #tpu.pipeline_mode<synchronous>, transform_indices = @transform_7, window_bounds = array<i64: 32, 16>}, {pipeline_mode = #tpu.pipeline_mode<synchronous>, transform_indices = @transform_8, window_bounds = array<i64: 1, 16>}, {transform_indices = @transform_9, window_bounds = array<i64: 128, 8>}, {transform_indices = @transform_10, window_bounds = array<i64: 128, 16>}]} {
    %c0 = arith.constant 0 : index
    %c0_0 = arith.constant 0 : index
    %0 = vector.load %arg1[%c0, %c0_0] : memref<128x32xf32, #tpu.memory_space<vmem>>, vector<128x32xf32>
    %1 = arith.truncf %0 : vector<128x32xf32> to vector<128x32xbf16>
    %c0_1 = arith.constant 0 : index
    %c0_2 = arith.constant 0 : index
    %2 = vector.load %arg2[%c0_1, %c0_2] : memref<32x32xbf16, #tpu.memory_space<vmem>>, vector<32x32xbf16>
    %cst = arith.constant dense<0.000000e+00> : vector<128x32xf32>
    %3 = tpu.matmul %1, %2, %cst {dimension_numbers = #tpu.dot_dimension_numbers<[1], [0], [0], [1], [0, 0, 1, 1], [], []>} : vector<128x32xbf16>, vector<32x32xbf16>, vector<128x32xf32> -> vector<128x32xf32>
    %c0_3 = arith.constant 0 : index
    %c0_4 = arith.constant 0 : index
    %4 = vector.load %arg3[%c0_3, %c0_4] : memref<1x32xf32, #tpu.memory_space<vmem>>, vector<1x32xf32>
    %5 = vector.broadcast %4 : vector<1x32xf32> to vector<128x32xf32>
    %6 = arith.addf %3, %5 : vector<128x32xf32>
    %cst_5 = arith.constant 0.000000e+00 : f32
    %7 = vector.broadcast %cst_5 : f32 to vector<128x32xf32>
    %8 = arith.maximumf %6, %7 : vector<128x32xf32>
    %9 = arith.truncf %8 : vector<128x32xf32> to vector<128x32xbf16>
    %c0_6 = arith.constant 0 : index
    %c0_7 = arith.constant 0 : index
    %10 = vector.load %arg4[%c0_6, %c0_7] : memref<32x8xbf16, #tpu.memory_space<vmem>>, vector<32x8xbf16>
    %cst_8 = arith.constant dense<0.000000e+00> : vector<128x8xf32>
    %11 = tpu.matmul %9, %10, %cst_8 {dimension_numbers = #tpu.dot_dimension_numbers<[1], [0], [0], [1], [0, 0, 1, 1], [], []>} : vector<128x32xbf16>, vector<32x8xbf16>, vector<128x8xf32> -> vector<128x8xf32>
    %c0_9 = arith.constant 0 : index
    %c0_10 = arith.constant 0 : index
    %12 = vector.load %arg5[%c0_9, %c0_10] : memref<1x8xf32, #tpu.memory_space<vmem>>, vector<1x8xf32>
    %13 = vector.broadcast %12 : vector<1x8xf32> to vector<128x8xf32>
    %14 = arith.addf %11, %13 : vector<128x8xf32>
    %15 = arith.negf %14 : vector<128x8xf32>
    %16 = math.exp %15 : vector<128x8xf32>
    %cst_11 = arith.constant 1.000000e+00 : f32
    %17 = vector.broadcast %cst_11 : f32 to vector<128x8xf32>
    %18 = arith.addf %17, %16 : vector<128x8xf32>
    %19 = arith.divf %17, %18 : vector<128x8xf32>
    %c0_12 = arith.constant 0 : index
    %c0_13 = arith.constant 0 : index
    %20 = vector.load %arg10[%c0_12, %c0_13] : memref<128x8xf32, #tpu.memory_space<vmem>>, vector<128x8xf32>
    tpu.vector_store %arg10[%c0_12, %c0_13], %19 {strides = array<i32>} : memref<128x8xf32, #tpu.memory_space<vmem>>, vector<128x8xf32>,
    %c0_14 = arith.constant 0 : index
    %c0_15 = arith.constant 0 : index
    %21 = vector.load %arg6[%c0_14, %c0_15] : memref<32x32xbf16, #tpu.memory_space<vmem>>, vector<32x32xbf16>
    %cst_16 = arith.constant dense<0.000000e+00> : vector<128x32xf32>
    %22 = tpu.matmul %1, %21, %cst_16 {dimension_numbers = #tpu.dot_dimension_numbers<[1], [0], [0], [1], [0, 0, 1, 1], [], []>} : vector<128x32xbf16>, vector<32x32xbf16>, vector<128x32xf32> -> vector<128x32xf32>
    %c0_17 = arith.constant 0 : index
    %c0_18 = arith.constant 0 : index
    %23 = vector.load %arg7[%c0_17, %c0_18] : memref<1x32xf32, #tpu.memory_space<vmem>>, vector<1x32xf32>
    %24 = vector.broadcast %23 : vector<1x32xf32> to vector<128x32xf32>
    %25 = arith.addf %22, %24 : vector<128x32xf32>
    %cst_19 = arith.constant 0.000000e+00 : f32
    %26 = vector.broadcast %cst_19 : f32 to vector<128x32xf32>
    %27 = arith.maximumf %25, %26 : vector<128x32xf32>
    %28 = arith.truncf %27 : vector<128x32xf32> to vector<128x32xbf16>
    %c0_20 = arith.constant 0 : index
    %c0_21 = arith.constant 0 : index
    %29 = vector.load %arg8[%c0_20, %c0_21] : memref<32x16xbf16, #tpu.memory_space<vmem>>, vector<32x16xbf16>
    %cst_22 = arith.constant dense<0.000000e+00> : vector<128x16xf32>
    %30 = tpu.matmul %28, %29, %cst_22 {dimension_numbers = #tpu.dot_dimension_numbers<[1], [0], [0], [1], [0, 0, 1, 1], [], []>} : vector<128x32xbf16>, vector<32x16xbf16>, vector<128x16xf32> -> vector<128x16xf32>
    %c0_23 = arith.constant 0 : index
    %c0_24 = arith.constant 0 : index
    %31 = vector.load %arg9[%c0_23, %c0_24] : memref<1x16xf32, #tpu.memory_space<vmem>>, vector<1x16xf32>
    %32 = vector.broadcast %31 : vector<1x16xf32> to vector<128x16xf32>
    %33 = arith.addf %30, %32 : vector<128x16xf32>
    %34 = arith.negf %33 : vector<128x16xf32>
    %35 = math.exp %34 : vector<128x16xf32>
    %cst_25 = arith.constant 1.000000e+00 : f32
    %36 = vector.broadcast %cst_25 : f32 to vector<128x16xf32>
    %37 = arith.addf %36, %35 : vector<128x16xf32>
    %38 = arith.divf %36, %37 : vector<128x16xf32>
    %c0_26 = arith.constant 0 : index
    %c0_27 = arith.constant 0 : index
    %39 = vector.load %arg11[%c0_26, %c0_27] : memref<128x16xf32, #tpu.memory_space<vmem>>, vector<128x16xf32>
    tpu.vector_store %arg11[%c0_26, %c0_27], %38 {strides = array<i32>} : memref<128x16xf32, #tpu.memory_space<vmem>>, vector<128x16xf32>,
    return
  }
  func.func @transform_0(%arg0: i32) -> (i32, i32) {
    %c0_i32 = arith.constant 0 : i32
    %c0_i32_0 = arith.constant 0 : i32
    return %arg0, %c0_i32 : i32, i32
  }
  func.func @transform_1(%arg0: i32) -> (i32, i32) {
    %c0_i32 = arith.constant 0 : i32
    %c0_i32_0 = arith.constant 0 : i32
    %c0_i32_1 = arith.constant 0 : i32
    return %c0_i32, %c0_i32_0 : i32, i32
  }
  func.func @transform_2(%arg0: i32) -> (i32, i32) {
    %c0_i32 = arith.constant 0 : i32
    %c0_i32_0 = arith.constant 0 : i32
    %c0_i32_1 = arith.constant 0 : i32
    return %c0_i32, %c0_i32_0 : i32, i32
  }
  func.func @transform_3(%arg0: i32) -> (i32, i32) {
    %c0_i32 = arith.constant 0 : i32
    %c0_i32_0 = arith.constant 0 : i32
    %c0_i32_1 = arith.constant 0 : i32
    return %c0_i32, %c0_i32_0 : i32, i32
  }
  func.func @transform_4(%arg0: i32) -> (i32, i32) {
    %c0_i32 = arith.constant 0 : i32
    %c0_i32_0 = arith.constant 0 : i32
    %c0_i32_1 = arith.constant 0 : i32
    return %c0_i32, %c0_i32_0 : i32, i32
  }
  func.func @transform_5(%arg0: i32) -> (i32, i32) {
    %c0_i32 = arith.constant 0 : i32
    %c0_i32_0 = arith.constant 0 : i32
    %c0_i32_1 = arith.constant 0 : i32
    return %c0_i32, %c0_i32_0 : i32, i32
  }
  func.func @transform_6(%arg0: i32) -> (i32, i32) {
    %c0_i32 = arith.constant 0 : i32
    %c0_i32_0 = arith.constant 0 : i32
    %c0_i32_1 = arith.constant 0 : i32
    return %c0_i32, %c0_i32_0 : i32, i32
  }
  func.func @transform_7(%arg0: i32) -> (i32, i32) {
    %c0_i32 = arith.constant 0 : i32
    %c0_i32_0 = arith.constant 0 : i32
    %c0_i32_1 = arith.constant 0 : i32
    return %c0_i32, %c0_i32_0 : i32, i32
  }
  func.func @transform_8(%arg0: i32) -> (i32, i32) {
    %c0_i32 = arith.constant 0 : i32
    %c0_i32_0 = arith.constant 0 : i32
    %c0_i32_1 = arith.constant 0 : i32
    return %c0_i32, %c0_i32_0 : i32, i32
  }
  func.func @transform_9(%arg0: i32) -> (i32, i32) {
    %c0_i32 = arith.constant 0 : i32
    %c0_i32_0 = arith.constant 0 : i32
    return %arg0, %c0_i32 : i32, i32
  }
  func.func @transform_10(%arg0: i32) -> (i32, i32) {
    %c0_i32 = arith.constant 0 : i32
    %c0_i32_0 = arith.constant 0 : i32
    return %arg0, %c0_i32 : i32, i32
  }
}

</mosaic_0001>

<llo_original>
// kernel: tpu_custom_call.1
$region0: #{tpu_custom_call.1}
  #allocation0 [shape = 'u32[]', space=smem, size = 0x4, offset = 0x4, fixed_abs, tag = 'smem constant byte address 0x4 - core index']
  #allocation1 [shape = 'u32[144,128]{1,0:T(1,128)}', space=vmem, size = 0x12000, scoped, tag = 'internal scratch']
  %s0 = inlined_call_operand.vmem [shape: f32[256,32], index: 0, kind: input, shape index: {}]
  %s1 = inlined_call_operand.vmem [shape: bf16[32,32], index: 1, kind: input, shape index: {}]
  %s2 = inlined_call_operand.vmem [shape: f32[1,32], index: 2, kind: input, shape index: {}]
  %s3 = inlined_call_operand.vmem [shape: bf16[32,8], index: 3, kind: input, shape index: {}]
  %s4 = inlined_call_operand.vmem [shape: f32[1,8], index: 4, kind: input, shape index: {}]
  %s5 = inlined_call_operand.vmem [shape: bf16[32,32], index: 5, kind: input, shape index: {}]
  %s6 = inlined_call_operand.vmem [shape: f32[1,32], index: 6, kind: input, shape index: {}]
  %s7 = inlined_call_operand.vmem [shape: bf16[32,16], index: 7, kind: input, shape index: {}]
  %s8 = inlined_call_operand.vmem [shape: f32[1,16], index: 8, kind: input, shape index: {}]
  %s9 = inlined_call_operand.vmem [shape: f32[256,8], index: 9, kind: output, shape index: {0}]
  %s10 = inlined_call_operand.vmem [shape: f32[256,16], index: 10, kind: output, shape index: {1}]
  %11 = xla_tuple %s9, %s10
  %s12 = sld [smem:[#allocation0]]
  $region77: #{tpu_custom_call.1} parent=0
    _
  %s14 = ssub.s32 1, %s12
  %s15 = scalar_select 0, %s14, %s12
  loop: start=0, step=1, limit=4
  $region2: #{tpu_custom_call.1} parent=0 // loop_pre_header
    _
  $region3: #{tpu_custom_call.1} parent=0 // loop_header
    %s17 = sphi 0, %s21
    %p18 = scmp.ge.s32.totalorder %s17, 4
    %s27 = sphi 0, %s29
    %s30 = sphi 0, %s27
    %s31 = sphi 0, %s30
    %s47 = sphi 0, %s31
    %s51 = sphi 0, %s51
    %s53 = sphi 0, %s51
    %s54 = sphi 0, %s53
    %s68 = sphi 0, %s54
    %s72 = sphi 0, %s72
    %s74 = sphi 0, %s72
    %s75 = sphi 0, %s74
    %s89 = sphi 0, %s75
    %s93 = sphi 0, %s93
    %s95 = sphi 0, %s93
    %s96 = sphi 0, %s95
    %s110 = sphi 0, %s96
    %s114 = sphi 0, %s114
    %s116 = sphi 0, %s114
    %s117 = sphi 0, %s116
    %s131 = sphi 0, %s117
    %s135 = sphi 0, %s135
    %s137 = sphi 0, %s135
    %s138 = sphi 0, %s137
    %s152 = sphi 0, %s138
    %s156 = sphi 0, %s156
    %s158 = sphi 0, %s156
    %s159 = sphi 0, %s158
    %s173 = sphi 0, %s159
    %s177 = sphi 0, %s177
    %s179 = sphi 0, %s177
    %s180 = sphi 0, %s179
    %s194 = sphi 0, %s180
    %s198 = sphi 0, %s198
    %s200 = sphi 0, %s198
    %s201 = sphi 0, %s200
    %s215 = sphi 0, %s201
    %s221 = sphi 0, %s223
    %s224 = sphi 0, %s221
    %s225 = sphi 0, %s224
    %s241 = sphi 0, %s225
    %s247 = sphi 0, %s249
    %s250 = sphi 0, %s247
    %s251 = sphi 0, %s250
    %s267 = sphi 0, %s251
  $region4: #{tpu_custom_call.1} parent=0 // loop_header_branch
    %20 = sbr.rel (%p18) target = $region8
  $region5: #{tpu_custom_call.1} parent=0 // loop_body
    %s22 = ssub.s32 %s17, 1
    %s23 = ssub.s32 %s17, 2
    %s24 = sadd.s32 %s17, 1
    %s25 = ssub.s32 %s17, %s24
    %p26 = scmp.eq.s32.totalorder %s25, 0
    %s28 = sadd.s32 %s27, 1
    %s29 = scalar_select %p26, %s27, %s28
    %p32 = pneg %p26
    %p33 = scmp.eq.s32.totalorder %s17, 1
    %p34 = por %p32, %p33
    %p35 = scmp.ne.s32.totalorder %s27, %s30
    %p36 = scmp.eq.s32.totalorder %s17, 0
    %p37 = por %p35, %p36
    %p38 = scmp.ne.s32.totalorder %s27, %s30
    %p39 = scmp.eq.s32.totalorder %s22, 1
    %p40 = por %p38, %p39
    %p41 = scmp.ne.s32.totalorder %s30, %s31
    %p42 = scmp.eq.s32.totalorder %s22, 0
    %p43 = por %p41, %p42
    %p44 = scmp.ne.s32.totalorder %s30, %s31
    %p45 = scmp.eq.s32.totalorder %s23, 1
    %p46 = por %p44, %p45
    %p48 = scmp.ne.s32.totalorder %s31, %s47
    %p49 = scmp.eq.s32.totalorder %s23, 0
    %p50 = por %p48, %p49
    %s52 = sadd.s32 %s51, 1
    %p55 = scmp.eq.s32.totalorder %s17, 1
    %p56 = scmp.ne.s32.totalorder %s51, %s53
    %p57 = scmp.eq.s32.totalorder %s17, 0
    %p58 = por %p56, %p57
    %p59 = scmp.ne.s32.totalorder %s51, %s53
    %p60 = scmp.eq.s32.totalorder %s22, 1
    %p61 = por %p59, %p60
    %p62 = scmp.ne.s32.totalorder %s53, %s54
    %p63 = scmp.eq.s32.totalorder %s22, 0
    %p64 = por %p62, %p63
    %p65 = scmp.ne.s32.totalorder %s53, %s54
    %p66 = scmp.eq.s32.totalorder %s23, 1
    %p67 = por %p65, %p66
    %p69 = scmp.ne.s32.totalorder %s54, %s68
    %p70 = scmp.eq.s32.totalorder %s23, 0
    %p71 = por %p69, %p70
    %s73 = sadd.s32 %s72, 1
    %p76 = scmp.eq.s32.totalorder %s17, 1
    %p77 = scmp.ne.s32.totalorder %s72, %s74
    %p78 = scmp.eq.s32.totalorder %s17, 0
    %p79 = por %p77, %p78
    %p80 = scmp.ne.s32.totalorder %s72, %s74
    %p81 = scmp.eq.s32.totalorder %s22, 1
    %p82 = por %p80, %p81
    %p83 = scmp.ne.s32.totalorder %s74, %s75
    %p84 = scmp.eq.s32.totalorder %s22, 0
    %p85 = por %p83, %p84
    %p86 = scmp.ne.s32.totalorder %s74, %s75
    %p87 = scmp.eq.s32.totalorder %s23, 1
    %p88 = por %p86, %p87
    %p90 = scmp.ne.s32.totalorder %s75, %s89
    %p91 = scmp.eq.s32.totalorder %s23, 0
    %p92 = por %p90, %p91
    %s94 = sadd.s32 %s93, 1
    %p97 = scmp.eq.s32.totalorder %s17, 1
    %p98 = scmp.ne.s32.totalorder %s93, %s95
    %p99 = scmp.eq.s32.totalorder %s17, 0
    %p100 = por %p98, %p99
    %p101 = scmp.ne.s32.totalorder %s93, %s95
    %p102 = scmp.eq.s32.totalorder %s22, 1
    %p103 = por %p101, %p102
    %p104 = scmp.ne.s32.totalorder %s95, %s96
    %p105 = scmp.eq.s32.totalorder %s22, 0
    %p106 = por %p104, %p105
    %p107 = scmp.ne.s32.totalorder %s95, %s96
    %p108 = scmp.eq.s32.totalorder %s23, 1
    %p109 = por %p107, %p108
    %p111 = scmp.ne.s32.totalorder %s96, %s110
    %p112 = scmp.eq.s32.totalorder %s23, 0
    %p113 = por %p111, %p112
    %s115 = sadd.s32 %s114, 1
    %p118 = scmp.eq.s32.totalorder %s17, 1
    %p119 = scmp.ne.s32.totalorder %s114, %s116
    %p120 = scmp.eq.s32.totalorder %s17, 0
    %p121 = por %p119, %p120
    %p122 = scmp.ne.s32.totalorder %s114, %s116
    %p123 = scmp.eq.s32.totalorder %s22, 1
    %p124 = por %p122, %p123
    %p125 = scmp.ne.s32.totalorder %s116, %s117
    %p126 = scmp.eq.s32.totalorder %s22, 0
    %p127 = por %p125, %p126
    %p128 = scmp.ne.s32.totalorder %s116, %s117
    %p129 = scmp.eq.s32.totalorder %s23, 1
    %p130 = por %p128, %p129
    %p132 = scmp.ne.s32.totalorder %s117, %s131
    %p133 = scmp.eq.s32.totalorder %s23, 0
    %p134 = por %p132, %p133
    %s136 = sadd.s32 %s135, 1
    %p139 = scmp.eq.s32.totalorder %s17, 1
    %p140 = scmp.ne.s32.totalorder %s135, %s137
    %p141 = scmp.eq.s32.totalorder %s17, 0
    %p142 = por %p140, %p141
    %p143 = scmp.ne.s32.totalorder %s135, %s137
    %p144 = scmp.eq.s32.totalorder %s22, 1
    %p145 = por %p143, %p144
    %p146 = scmp.ne.s32.totalorder %s137, %s138
    %p147 = scmp.eq.s32.totalorder %s22, 0
    %p148 = por %p146, %p147
    %p149 = scmp.ne.s32.totalorder %s137, %s138
    %p150 = scmp.eq.s32.totalorder %s23, 1
    %p151 = por %p149, %p150
    %p153 = scmp.ne.s32.totalorder %s138, %s152
    %p154 = scmp.eq.s32.totalorder %s23, 0
    %p155 = por %p153, %p154
    %s157 = sadd.s32 %s156, 1
    %p160 = scmp.eq.s32.totalorder %s17, 1
    %p161 = scmp.ne.s32.totalorder %s156, %s158
    %p162 = scmp.eq.s32.totalorder %s17, 0
    %p163 = por %p161, %p162
    %p164 = scmp.ne.s32.totalorder %s156, %s158
    %p165 = scmp.eq.s32.totalorder %s22, 1
    %p166 = por %p164, %p165
    %p167 = scmp.ne.s32.totalorder %s158, %s159
    %p168 = scmp.eq.s32.totalorder %s22, 0
    %p169 = por %p167, %p168
    %p170 = scmp.ne.s32.totalorder %s158, %s159
    %p171 = scmp.eq.s32.totalorder %s23, 1
    %p172 = por %p170, %p171
    %p174 = scmp.ne.s32.totalorder %s159, %s173
    %p175 = scmp.eq.s32.totalorder %s23, 0
    %p176 = por %p174, %p175
    %s178 = sadd.s32 %s177, 1
    %p181 = scmp.eq.s32.totalorder %s17, 1
    %p182 = scmp.ne.s32.totalorder %s177, %s179
    %p183 = scmp.eq.s32.totalorder %s17, 0
    %p184 = por %p182, %p183
    %p185 = scmp.ne.s32.totalorder %s177, %s179
    %p186 = scmp.eq.s32.totalorder %s22, 1
    %p187 = por %p185, %p186
    %p188 = scmp.ne.s32.totalorder %s179, %s180
    %p189 = scmp.eq.s32.totalorder %s22, 0
    %p190 = por %p188, %p189
    %p191 = scmp.ne.s32.totalorder %s179, %s180
    %p192 = scmp.eq.s32.totalorder %s23, 1
    %p193 = por %p191, %p192
    %p195 = scmp.ne.s32.totalorder %s180, %s194
    %p196 = scmp.eq.s32.totalorder %s23, 0
    %p197 = por %p195, %p196
    %s199 = sadd.s32 %s198, 1
    %p202 = scmp.eq.s32.totalorder %s17, 1
    %p203 = scmp.ne.s32.totalorder %s198, %s200
    %p204 = scmp.eq.s32.totalorder %s17, 0
    %p205 = por %p203, %p204
    %p206 = scmp.ne.s32.totalorder %s198, %s200
    %p207 = scmp.eq.s32.totalorder %s22, 1
    %p208 = por %p206, %p207
    %p209 = scmp.ne.s32.totalorder %s200, %s201
    %p210 = scmp.eq.s32.totalorder %s22, 0
    %p211 = por %p209, %p210
    %p212 = scmp.ne.s32.totalorder %s200, %s201
    %p213 = scmp.eq.s32.totalorder %s23, 1
    %p214 = por %p212, %p213
    %p216 = scmp.ne.s32.totalorder %s201, %s215
    %p217 = scmp.eq.s32.totalorder %s23, 0
    %p218 = por %p216, %p217
    %s219 = ssub.s32 %s17, %s24
    %p220 = scmp.eq.s32.totalorder %s219, 0
    %s222 = sadd.s32 %s221, 1
    %s223 = scalar_select %p220, %s221, %s222
    %p226 = pneg %p220
    %p227 = scmp.eq.s32.totalorder %s17, 1
    %p228 = por %p226, %p227
    %p229 = scmp.ne.s32.totalorder %s221, %s224
    %p230 = scmp.eq.s32.totalorder %s17, 0
    %p231 = por %p229, %p230
    %p232 = scmp.ne.s32.totalorder %s221, %s224
    %p233 = scmp.eq.s32.totalorder %s22, 1
    %p234 = por %p232, %p233
    %p235 = scmp.ne.s32.totalorder %s224, %s225
    %p236 = scmp.eq.s32.totalorder %s22, 0
    %p237 = por %p235, %p236
    %p238 = scmp.ne.s32.totalorder %s224, %s225
    %p239 = scmp.eq.s32.totalorder %s23, 1
    %p240 = por %p238, %p239
    %p242 = scmp.ne.s32.totalorder %s225, %s241
    %p243 = scmp.eq.s32.totalorder %s23, 0
    %p244 = por %p242, %p243
    %s245 = ssub.s32 %s17, %s24
    %p246 = scmp.eq.s32.totalorder %s245, 0
    %s248 = sadd.s32 %s247, 1
    %s249 = scalar_select %p246, %s247, %s248
    %p252 = pneg %p246
    %p253 = scmp.eq.s32.totalorder %s17, 1
    %p254 = por %p252, %p253
    %p255 = scmp.ne.s32.totalorder %s247, %s250
    %p256 = scmp.eq.s32.totalorder %s17, 0
    %p257 = por %p255, %p256
    %p258 = scmp.ne.s32.totalorder %s247, %s250
    %p259 = scmp.eq.s32.totalorder %s22, 1
    %p260 = por %p258, %p259
    %p261 = scmp.ne.s32.totalorder %s250, %s251
    %p262 = scmp.eq.s32.totalorder %s22, 0
    %p263 = por %p261, %p262
    %p264 = scmp.ne.s32.totalorder %s250, %s251
    %p265 = scmp.eq.s32.totalorder %s23, 1
    %p266 = por %p264, %p265
    %p268 = scmp.ne.s32.totalorder %s251, %s267
    %p269 = scmp.eq.s32.totalorder %s23, 0
    %p270 = por %p268, %p269
    %p271 = scmp.le.s32.totalorder 1, %s17
    %p272 = scmp.lt.s32.totalorder %s17, 3
    %p273 = pnand %p271, %p272
    %p274 = pneg %p273
    // Predicated region
    $region9: #{tpu_custom_call.1} parent=5 // pred_check
      _
    $region10: #{tpu_custom_call.1} parent=5 // pred_check_branch
      %276 = sbr.rel (%p273) target = $region12
    $region11: #{tpu_custom_call.1} parent=5 // pred_region
      %s277 = ssub.s32 %s17, 1
      // Predicated region
      $region13: #{tpu_custom_call.1} parent=11 // pred_check
        %p278 = pneg %p64
      $region14: #{tpu_custom_call.1} parent=11 // pred_check_branch
        %280 = sbr.rel (%p278) target = $region16
      $region15: #{tpu_custom_call.1} parent=11 // pred_region
        _
      $region16: #{tpu_custom_call.1} parent=11 // pred_fallthru
        _
      // Predicated region
      $region17: #{tpu_custom_call.1} parent=11 // pred_check
        %p281 = pneg %p85
      $region18: #{tpu_custom_call.1} parent=11 // pred_check_branch
        %283 = sbr.rel (%p281) target = $region20
      $region19: #{tpu_custom_call.1} parent=11 // pred_region
        _
      $region20: #{tpu_custom_call.1} parent=11 // pred_fallthru
        _
      // Predicated region
      $region21: #{tpu_custom_call.1} parent=11 // pred_check
        %p284 = pneg %p106
      $region22: #{tpu_custom_call.1} parent=11 // pred_check_branch
        %286 = sbr.rel (%p284) target = $region24
      $region23: #{tpu_custom_call.1} parent=11 // pred_region
        _
      $region24: #{tpu_custom_call.1} parent=11 // pred_fallthru
        _
      // Predicated region
      $region25: #{tpu_custom_call.1} parent=11 // pred_check
        %p287 = pneg %p127
      $region26: #{tpu_custom_call.1} parent=11 // pred_check_branch
        %289 = sbr.rel (%p287) target = $region28
      $region27: #{tpu_custom_call.1} parent=11 // pred_region
        _
      $region28: #{tpu_custom_call.1} parent=11 // pred_fallthru
        _
      // Predicated region
      $region29: #{tpu_custom_call.1} parent=11 // pred_check
        %p290 = pneg %p148
      $region30: #{tpu_custom_call.1} parent=11 // pred_check_branch
        %292 = sbr.rel (%p290) target = $region32
      $region31: #{tpu_custom_call.1} parent=11 // pred_region
        _
      $region32: #{tpu_custom_call.1} parent=11 // pred_fallthru
        _
      // Predicated region
      $region33: #{tpu_custom_call.1} parent=11 // pred_check
        %p293 = pneg %p169
      $region34: #{tpu_custom_call.1} parent=11 // pred_check_branch
        %295 = sbr.rel (%p293) target = $region36
      $region35: #{tpu_custom_call.1} parent=11 // pred_region
        _
      $region36: #{tpu_custom_call.1} parent=11 // pred_fallthru
        _
      // Predicated region
      $region37: #{tpu_custom_call.1} parent=11 // pred_check
        %p296 = pneg %p190
      $region38: #{tpu_custom_call.1} parent=11 // pred_check_branch
        %298 = sbr.rel (%p296) target = $region40
      $region39: #{tpu_custom_call.1} parent=11 // pred_region
        _
      $region40: #{tpu_custom_call.1} parent=11 // pred_fallthru
        _
      // Predicated region
      $region41: #{tpu_custom_call.1} parent=11 // pred_check
        %p299 = pneg %p211
      $region42: #{tpu_custom_call.1} parent=11 // pred_check_branch
        %301 = sbr.rel (%p299) target = $region44
      $region43: #{tpu_custom_call.1} parent=11 // pred_region
        _
      $region44: #{tpu_custom_call.1} parent=11 // pred_fallthru
        _
    $region12: #{tpu_custom_call.1} parent=5 // pred_fallthru
      _
    %p302 = scmp.lt.s32.totalorder %s17, 2
    // Predicated region
    $region45: #{tpu_custom_call.1} parent=5 // pred_check
      %p303 = pneg %p302
    $region46: #{tpu_custom_call.1} parent=5 // pred_check_branch
      %305 = sbr.rel (%p303) target = $region48
    $region47: #{tpu_custom_call.1} parent=5 // pred_region
      // Predicated region
      $region49: #{tpu_custom_call.1} parent=47 // pred_check
        %p306 = pneg %p37
      $region50: #{tpu_custom_call.1} parent=47 // pred_check_branch
        %308 = sbr.rel (%p306) target = $region52
      $region51: #{tpu_custom_call.1} parent=47 // pred_region
        %s309 = smul.u32 16, %s17
        %p310 = scmp.lt.s32.totalorder %s309, 31
        %s311 = scalar_select %p310, %s309, 31
        %s312 = smul.addr %s311, 8
        %s313 = scalar_lea.vmem %s0, %s312
        %s314 = smul.u32 16, %s17
      $region52: #{tpu_custom_call.1} parent=47 // pred_fallthru
        _
    $region48: #{tpu_custom_call.1} parent=5 // pred_fallthru
      _
    %p315 = scmp.le.s32.totalorder 1, %s17
    %p316 = scmp.lt.s32.totalorder %s17, 3
    %p317 = pnand %p315, %p316
    %p318 = pneg %p317
    // Predicated region
    $region53: #{tpu_custom_call.1} parent=5 // pred_check
      _
    $region54: #{tpu_custom_call.1} parent=5 // pred_check_branch
      %320 = sbr.rel (%p317) target = $region56
    $region55: #{tpu_custom_call.1} parent=5 // pred_region
      %s321 = ssub.s32 %s17, 1
      %s322 = smul.u32 16, %s22
      %p323 = scmp.lt.s32.totalorder %s322, 31
      %s324 = scalar_select %p323, %s322, 31
      %s325 = smul.addr %s324, 8
      %s326 = scalar_lea.vmem %s0, %s325
      %p327 = pneg %p43
      %p328 = pneg %p40
      %p329 = pneg %p64
      %p330 = pneg %p61
      %p331 = pneg %p85
      %p332 = pneg %p82
      %p333 = pneg %p106
      %p334 = pneg %p103
      %p335 = pneg %p127
      %p336 = pneg %p124
      %p337 = pneg %p148
      %p338 = pneg %p145
      %p339 = pneg %p169
      %p340 = pneg %p166
      %p341 = pneg %p190
      %p342 = pneg %p187
      %p343 = pneg %p211
      %p344 = pneg %p208
      %p345 = pneg %p237
      %p346 = pneg %p234
      %s347 = smul.u32 16, %s22
      %p348 = scmp.lt.s32.totalorder %s347, 31
      %s349 = scalar_select %p348, %s347, 31
      %s350 = smul.addr %s349, 8
      %s351 = scalar_lea.vmem %s9, %s350
      %p352 = pneg %p263
      %p353 = pneg %p260
      %s354 = smul.u32 16, %s22
      %p355 = scmp.lt.s32.totalorder %s354, 31
      %s356 = scalar_select %p355, %s354, 31
      %s357 = smul.addr %s356, 8
      %s358 = scalar_lea.vmem %s10, %s357
      %s359 = smul.u32 16, %s22
      %p360 = scmp.lt.s32.totalorder %s359, 31
      %s361 = scalar_select %p360, %s359, 31
      %s362 = smul.addr %s361, 8
      %s363 = scalar_lea.vmem %s0, %s362
      %s364 = smul.u32 16, %s22
      %s365 = smul.u32 16, %s22
      %p366 = scmp.lt.s32.totalorder %s365, 31
      %s367 = scalar_select %p366, %s365, 31
      %s368 = smul.addr %s367, 8
      %s369 = scalar_lea.vmem %s9, %s368
      %s370 = smul.u32 16, %s22
      %s371 = smul.u32 16, %s22
      %p372 = scmp.lt.s32.totalorder %s371, 31
      %s373 = scalar_select %p372, %s371, 31
      %s374 = smul.addr %s373, 8
      %s375 = scalar_lea.vmem %s10, %s374
      %s376 = smul.u32 16, %s22
      %v378 = vld [vmem:[%s363] sm:$0xff]
      %v379 = vld [vmem:[%s363 + $0x8] sm:$0xff]
      %v380 = vld [vmem:[%s363 + $0x10] sm:$0xff]
      %v381 = vld [vmem:[%s363 + $0x18] sm:$0xff]
      %v382 = vld [vmem:[%s363 + $0x20] sm:$0xff]
      %v383 = vld [vmem:[%s363 + $0x28] sm:$0xff]
      %v384 = vld [vmem:[%s363 + $0x30] sm:$0xff]
      %v385 = vld [vmem:[%s363 + $0x38] sm:$0xff]
      %v386 = vld [vmem:[%s363 + $0x40] sm:$0xff]
      %v387 = vld [vmem:[%s363 + $0x48] sm:$0xff]
      %v388 = vld [vmem:[%s363 + $0x50] sm:$0xff]
      %v389 = vld [vmem:[%s363 + $0x58] sm:$0xff]
      %v390 = vld [vmem:[%s363 + $0x60] sm:$0xff]
      %v391 = vld [vmem:[%s363 + $0x68] sm:$0xff]
      %v392 = vld [vmem:[%s363 + $0x70] sm:$0xff]
      %v393 = vld [vmem:[%s363 + $0x78] sm:$0xff]
      %v394 = vpack.c.bf16 %v379, %v378
      %v395 = vpack.c.bf16 %v381, %v380
      %v396 = vpack.c.bf16 %v383, %v382
      %v397 = vpack.c.bf16 %v385, %v384
      %v398 = vpack.c.bf16 %v387, %v386
      %v399 = vpack.c.bf16 %v389, %v388
      %v400 = vpack.c.bf16 %v391, %v390
      %v401 = vpack.c.bf16 %v393, %v392
      %v402 = vld [vmem:[%s1] sm:$0xf]
      %v403 = vld [vmem:[%s1 + $0x4] sm:$0xf]
      %v404 = vld [vmem:[%s1 + $0x8] sm:$0xf]
      %v405 = vld [vmem:[%s1 + $0xc] sm:$0xf]
      %v406 = vld [vmem:[%s2] sm:$0x1]
      %v408 = vlaneseq
      %v409 = vshrl.u32 %v408, 7
      %v410 = vsub.s32 0, %v409
      %v411 = vrot.slane %v406, %v410
      %v417 = vunpack.c.l.b16 %v402
      %v418 = vunpack.c.l.b16 %v403
      %v419 = vunpack.c.l.b16 %v404
      %v420 = vunpack.c.l.b16 %v405
      %v421 = vpack.c.b16 %v418, %v417
      %v422 = vpack.c.b16 %v420, %v419
      %vm425 = vcmask 261120
      %v427 = vsel %vm425, %v394, 0
      %v430 = vsel %vm425, %v395, 0
      %v433 = vsel %vm425, %v396, 0
      %v436 = vsel %vm425, %v397, 0
      %v439 = vsel %vm425, %v398, 0
      %v442 = vsel %vm425, %v399, 0
      %v445 = vsel %vm425, %v400, 0
      %v448 = vsel %vm425, %v401, 0
      %450 = vmatprep.subr.bf16.mxu0 0
      %451 = vmatpush1.bf16.msra.mxu0 %v421
      %452 = vmatprep.subr.bf16.mxu0 0
      %453 = vmatpush1.bf16.msra.mxu0 %v422
      %454 = vmatprep.subr.bf16.mxu0 0
      %455 = vmatpush1.bf16.msra.mxu0 0
      %456 = vmatprep.subr.bf16.mxu0 0
      %457 = vmatpush1.bf16.msra.mxu0 0
      %458 = vmatprep.subr.bf16.mxu0 0
      %459 = vmatpush1.bf16.msra.mxu0 0
      %460 = vmatprep.subr.bf16.mxu0 0
      %461 = vmatpush1.bf16.msra.mxu0 0
      %462 = vmatprep.subr.bf16.mxu0 0
      %463 = vmatpush1.bf16.msra.mxu0 0
      %464 = vmatprep.subr.bf16.mxu0 0
      %465 = vmatpush1.bf16.msra.mxu0 0
      %466 = vmatprep.subr.bf16.mxu0 0
      %467 = vmatpush1.bf16.msra.mxu0 0
      %468 = vmatprep.subr.bf16.mxu0 0
      %469 = vmatpush1.bf16.msra.mxu0 0
      %470 = vmatprep.subr.bf16.mxu0 0
      %471 = vmatpush1.bf16.msra.mxu0 0
      %472 = vmatprep.subr.bf16.mxu0 0
      %473 = vmatpush1.bf16.msra.mxu0 0
      %474 = vmatprep.subr.bf16.mxu0 0
      %475 = vmatpush1.bf16.msra.mxu0 0
      %476 = vmatprep.subr.bf16.mxu0 0
      %477 = vmatpush1.bf16.msra.mxu0 0
      %478 = vmatprep.subr.bf16.mxu0 0
      %479 = vmatpush1.bf16.msra.mxu0 0
      %480 = vmatprep.subr.bf16.mxu0 0
      %481 = vmatpush1.bf16.msra.mxu0 0
      %482 = vmatprep.mubr.bf16.mxu0 0
      %483 = vmatmul.mubr.bf16.gmra.mrb[0].mxu0 %v427
      %v484 = vpop.f32.mrb[0].mxu0
      %v485 = vadd.f32 %v411, %v484
      %v486 = vpop.f32.mrb[0].mxu0
      %v487 = vpop.f32.mrb[0].mxu0
      %v488 = vadd.f32 %v411, %v487
      %v489 = vpop.f32.mrb[0].mxu0
      %490 = vmatprep.mubr.bf16.mxu0 0
      %491 = vmatmul.mubr.bf16.gmra.mrb[0].mxu0 %v430
      %v492 = vpop.f32.mrb[0].mxu0
      %v493 = vadd.f32 %v411, %v492
      %v494 = vpop.f32.mrb[0].mxu0
      %v495 = vpop.f32.mrb[0].mxu0
      %v496 = vadd.f32 %v411, %v495
      %v497 = vpop.f32.mrb[0].mxu0
      %498 = vmatprep.mubr.bf16.mxu0 0
      %499 = vmatmul.mubr.bf16.gmra.mrb[0].mxu0 %v433
      %v500 = vpop.f32.mrb[0].mxu0
      %v501 = vadd.f32 %v411, %v500
      %v502 = vpop.f32.mrb[0].mxu0
      %v503 = vpop.f32.mrb[0].mxu0
      %v504 = vadd.f32 %v411, %v503
      %v505 = vpop.f32.mrb[0].mxu0
      %506 = vmatprep.mubr.bf16.mxu0 0
      %507 = vmatmul.mubr.bf16.gmra.mrb[0].mxu0 %v436
      %v508 = vpop.f32.mrb[0].mxu0
      %v509 = vadd.f32 %v411, %v508
      %v510 = vpop.f32.mrb[0].mxu0
      %v511 = vpop.f32.mrb[0].mxu0
      %v512 = vadd.f32 %v411, %v511
      %v513 = vpop.f32.mrb[0].mxu0
      %514 = vmatprep.mubr.bf16.mxu0 0
      %515 = vmatmul.mubr.bf16.gmra.mrb[0].mxu0 %v439
      %v516 = vpop.f32.mrb[0].mxu0
      %v517 = vadd.f32 %v411, %v516
      %v518 = vpop.f32.mrb[0].mxu0
      %v519 = vpop.f32.mrb[0].mxu0
      %v520 = vadd.f32 %v411, %v519
      %v521 = vpop.f32.mrb[0].mxu0
      %522 = vmatprep.mubr.bf16.mxu0 0
      %523 = vmatmul.mubr.bf16.gmra.mrb[0].mxu0 %v442
      %v524 = vpop.f32.mrb[0].mxu0
      %v525 = vadd.f32 %v411, %v524
      %v526 = vpop.f32.mrb[0].mxu0
      %v527 = vpop.f32.mrb[0].mxu0
      %v528 = vadd.f32 %v411, %v527
      %v529 = vpop.f32.mrb[0].mxu0
      %530 = vmatprep.mubr.bf16.mxu0 0
      %531 = vmatmul.mubr.bf16.gmra.mrb[0].mxu0 %v445
      %v532 = vpop.f32.mrb[0].mxu0
      %v533 = vadd.f32 %v411, %v532
      %v534 = vpop.f32.mrb[0].mxu0
      %v535 = vpop.f32.mrb[0].mxu0
      %v536 = vadd.f32 %v411, %v535
      %v537 = vpop.f32.mrb[0].mxu0
      %538 = vmatprep.mubr.bf16.mxu0 0
      %539 = vmatmul.mubr.bf16.gmra.mrb[0].mxu0 %v448
      %v540 = vpop.f32.mrb[0].mxu0
      %v541 = vadd.f32 %v411, %v540
      %v542 = vpop.f32.mrb[0].mxu0
      %v543 = vpop.f32.mrb[0].mxu0
      %v544 = vadd.f32 %v411, %v543
      %v545 = vpop.f32.mrb[0].mxu0
      %546 = vdwg.mxu0
      %v547 = vmax.f32 %v485, 0.0
      %v548 = vmax.f32 %v488, 0.0
      %v549 = vmax.f32 %v493, 0.0
      %v550 = vmax.f32 %v496, 0.0
      %v551 = vmax.f32 %v501, 0.0
      %v552 = vmax.f32 %v504, 0.0
      %v553 = vmax.f32 %v509, 0.0
      %v554 = vmax.f32 %v512, 0.0
      %v555 = vmax.f32 %v517, 0.0
      %v556 = vmax.f32 %v520, 0.0
      %v557 = vmax.f32 %v525, 0.0
      %v558 = vmax.f32 %v528, 0.0
      %v559 = vmax.f32 %v533, 0.0
      %v560 = vmax.f32 %v536, 0.0
      %v561 = vmax.f32 %v541, 0.0
      %v562 = vmax.f32 %v544, 0.0
      %v563 = vpack.c.bf16 %v548, %v547
      %v564 = vpack.c.bf16 %v550, %v549
      %v565 = vpack.c.bf16 %v552, %v551
      %v566 = vpack.c.bf16 %v554, %v553
      %v567 = vpack.c.bf16 %v556, %v555
      %v568 = vpack.c.bf16 %v558, %v557
      %v569 = vpack.c.bf16 %v560, %v559
      %v570 = vpack.c.bf16 %v562, %v561
      %v571 = vld [vmem:[%s3] sm:$0xf]
      %v572 = vld [vmem:[%s3 + $0x4] sm:$0xf]
      %v573 = vld [vmem:[%s3 + $0x8] sm:$0xf]
      %v574 = vld [vmem:[%s3 + $0xc] sm:$0xf]
      %v575 = vld [vmem:[%s4] sm:$0x1]
      %v577 = vlaneseq
      %v578 = vshrl.u32 %v577, 7
      %v579 = vsub.s32 0, %v578
      %v580 = vrot.slane %v575, %v579
      %v586 = vunpack.c.l.b16 %v571
      %v587 = vunpack.c.l.b16 %v572
      %v588 = vunpack.c.l.b16 %v573
      %v589 = vunpack.c.l.b16 %v574
      %v590 = vpack.c.b16 %v587, %v586
      %v591 = vpack.c.b16 %v589, %v588
      %v595 = vsel %vm425, %v563, 0
      %v598 = vsel %vm425, %v564, 0
      %v601 = vsel %vm425, %v565, 0
      %v604 = vsel %vm425, %v566, 0
      %v607 = vsel %vm425, %v567, 0
      %v610 = vsel %vm425, %v568, 0
      %v613 = vsel %vm425, %v569, 0
      %v616 = vsel %vm425, %v570, 0
      %618 = vmatprep.subr.bf16.mxu0 0
      %619 = vmatpush1.bf16.msra.mxu0 %v590
      %620 = vmatprep.subr.bf16.mxu0 0
      %621 = vmatpush1.bf16.msra.mxu0 %v591
      %622 = vmatprep.subr.bf16.mxu0 0
      %623 = vmatpush1.bf16.msra.mxu0 0
      %624 = vmatprep.subr.bf16.mxu0 0
      %625 = vmatpush1.bf16.msra.mxu0 0
      %626 = vmatprep.subr.bf16.mxu0 0
      %627 = vmatpush1.bf16.msra.mxu0 0
      %628 = vmatprep.subr.bf16.mxu0 0
      %629 = vmatpush1.bf16.msra.mxu0 0
      %630 = vmatprep.subr.bf16.mxu0 0
      %631 = vmatpush1.bf16.msra.mxu0 0
      %632 = vmatprep.subr.bf16.mxu0 0
      %633 = vmatpush1.bf16.msra.mxu0 0
      %634 = vmatprep.subr.bf16.mxu0 0
      %635 = vmatpush1.bf16.msra.mxu0 0
      %636 = vmatprep.subr.bf16.mxu0 0
      %637 = vmatpush1.bf16.msra.mxu0 0
      %638 = vmatprep.subr.bf16.mxu0 0
      %639 = vmatpush1.bf16.msra.mxu0 0
      %640 = vmatprep.subr.bf16.mxu0 0
      %641 = vmatpush1.bf16.msra.mxu0 0
      %642 = vmatprep.subr.bf16.mxu0 0
      %643 = vmatpush1.bf16.msra.mxu0 0
      %644 = vmatprep.subr.bf16.mxu0 0
      %645 = vmatpush1.bf16.msra.mxu0 0
      %646 = vmatprep.subr.bf16.mxu0 0
      %647 = vmatpush1.bf16.msra.mxu0 0
      %648 = vmatprep.subr.bf16.mxu0 0
      %649 = vmatpush1.bf16.msra.mxu0 0
      %650 = vmatprep.mubr.bf16.mxu0 0
      %651 = vmatmul.mubr.bf16.gmra.mrb[0].mxu0 %v595
      %v652 = vpop.f32.mrb[0].mxu0
      %v653 = vadd.f32 %v580, %v652
      %v654 = vpop.f32.mrb[0].mxu0
      %v655 = vpop.f32.mrb[0].mxu0
      %v656 = vadd.f32 %v580, %v655
      %v657 = vpop.f32.mrb[0].mxu0
      %658 = vmatprep.mubr.bf16.mxu0 0
      %659 = vmatmul.mubr.bf16.gmra.mrb[0].mxu0 %v598
      %v660 = vpop.f32.mrb[0].mxu0
      %v661 = vadd.f32 %v580, %v660
      %v662 = vpop.f32.mrb[0].mxu0
      %v663 = vpop.f32.mrb[0].mxu0
      %v664 = vadd.f32 %v580, %v663
      %v665 = vpop.f32.mrb[0].mxu0
      %666 = vmatprep.mubr.bf16.mxu0 0
      %667 = vmatmul.mubr.bf16.gmra.mrb[0].mxu0 %v601
      %v668 = vpop.f32.mrb[0].mxu0
      %v669 = vadd.f32 %v580, %v668
      %v670 = vpop.f32.mrb[0].mxu0
      %v671 = vpop.f32.mrb[0].mxu0
      %v672 = vadd.f32 %v580, %v671
      %v673 = vpop.f32.mrb[0].mxu0
      %674 = vmatprep.mubr.bf16.mxu0 0
      %675 = vmatmul.mubr.bf16.gmra.mrb[0].mxu0 %v604
      %v676 = vpop.f32.mrb[0].mxu0
      %v677 = vadd.f32 %v580, %v676
      %v678 = vpop.f32.mrb[0].mxu0
      %v679 = vpop.f32.mrb[0].mxu0
      %v680 = vadd.f32 %v580, %v679
      %v681 = vpop.f32.mrb[0].mxu0
      %682 = vmatprep.mubr.bf16.mxu0 0
      %683 = vmatmul.mubr.bf16.gmra.mrb[0].mxu0 %v607
      %v684 = vpop.f32.mrb[0].mxu0
      %v685 = vadd.f32 %v580, %v684
      %v686 = vpop.f32.mrb[0].mxu0
      %v687 = vpop.f32.mrb[0].mxu0
      %v688 = vadd.f32 %v580, %v687
      %v689 = vpop.f32.mrb[0].mxu0
      %690 = vmatprep.mubr.bf16.mxu0 0
      %691 = vmatmul.mubr.bf16.gmra.mrb[0].mxu0 %v610
      %v692 = vpop.f32.mrb[0].mxu0
      %v693 = vadd.f32 %v580, %v692
      %v694 = vpop.f32.mrb[0].mxu0
      %v695 = vpop.f32.mrb[0].mxu0
      %v696 = vadd.f32 %v580, %v695
      %v697 = vpop.f32.mrb[0].mxu0
      %698 = vmatprep.mubr.bf16.mxu0 0
      %699 = vmatmul.mubr.bf16.gmra.mrb[0].mxu0 %v613
      %v700 = vpop.f32.mrb[0].mxu0
      %v701 = vadd.f32 %v580, %v700
      %v702 = vpop.f32.mrb[0].mxu0
      %v703 = vpop.f32.mrb[0].mxu0
      %v704 = vadd.f32 %v580, %v703
      %v705 = vpop.f32.mrb[0].mxu0
      %706 = vmatprep.mubr.bf16.mxu0 0
      %707 = vmatmul.mubr.bf16.gmra.mrb[0].mxu0 %v616
      %v708 = vpop.f32.mrb[0].mxu0
      %v709 = vadd.f32 %v580, %v708
      %v710 = vpop.f32.mrb[0].mxu0
      %v711 = vpop.f32.mrb[0].mxu0
      %v712 = vadd.f32 %v580, %v711
      %v713 = vpop.f32.mrb[0].mxu0
      %714 = vdwg.mxu0
      %v715 = vxor.u32 %v653, 2147483648
      %v716 = vxor.u32 %v656, 2147483648
      %v717 = vxor.u32 %v661, 2147483648
      %v718 = vxor.u32 %v664, 2147483648
      %v719 = vxor.u32 %v669, 2147483648
      %v720 = vxor.u32 %v672, 2147483648
      %v721 = vxor.u32 %v677, 2147483648
      %v722 = vxor.u32 %v680, 2147483648
      %v723 = vxor.u32 %v685, 2147483648
      %v724 = vxor.u32 %v688, 2147483648
      %v725 = vxor.u32 %v693, 2147483648
      %v726 = vxor.u32 %v696, 2147483648
      %v727 = vxor.u32 %v701, 2147483648
      %v728 = vxor.u32 %v704, 2147483648
      %v729 = vxor.u32 %v709, 2147483648
      %v730 = vxor.u32 %v712, 2147483648
      %v731 = vmul.f32 %v715, 1.442695
      %v732 = vpow.pop %v731
      %v733 = vmul.f32 %v716, 1.442695
      %v734 = vpow.pop %v733
      %v735 = vmul.f32 %v717, 1.442695
      %v736 = vpow.pop %v735
      %v737 = vmul.f32 %v718, 1.442695
      %v738 = vpow.pop %v737
      %v739 = vmul.f32 %v719, 1.442695
      %v740 = vpow.pop %v739
      %v741 = vmul.f32 %v720, 1.442695
      %v742 = vpow.pop %v741
      %v743 = vmul.f32 %v721, 1.442695
      %v744 = vpow.pop %v743
      %v745 = vmul.f32 %v722, 1.442695
      %v746 = vpow.pop %v745
      %v747 = vmul.f32 %v723, 1.442695
      %v748 = vpow.pop %v747
      %v749 = vmul.f32 %v724, 1.442695
      %v750 = vpow.pop %v749
      %v751 = vmul.f32 %v725, 1.442695
      %v752 = vpow.pop %v751
      %v753 = vmul.f32 %v726, 1.442695
      %v754 = vpow.pop %v753
      %v755 = vmul.f32 %v727, 1.442695
      %v756 = vpow.pop %v755
      %v757 = vmul.f32 %v728, 1.442695
      %v758 = vpow.pop %v757
      %v759 = vmul.f32 %v729, 1.442695
      %v760 = vpow.pop %v759
      %v761 = vmul.f32 %v730, 1.442695
      %v762 = vpow.pop %v761
      %v763 = vadd.f32 %v732, 1.0
      %v764 = vadd.f32 %v734, 1.0
      %v765 = vadd.f32 %v736, 1.0
      %v766 = vadd.f32 %v738, 1.0
      %v767 = vadd.f32 %v740, 1.0
      %v768 = vadd.f32 %v742, 1.0
      %v769 = vadd.f32 %v744, 1.0
      %v770 = vadd.f32 %v746, 1.0
      %v771 = vadd.f32 %v748, 1.0
      %v772 = vadd.f32 %v750, 1.0
      %v773 = vadd.f32 %v752, 1.0
      %v774 = vadd.f32 %v754, 1.0
      %v775 = vadd.f32 %v756, 1.0
      %v776 = vadd.f32 %v758, 1.0
      %v777 = vadd.f32 %v760, 1.0
      %v778 = vadd.f32 %v762, 1.0
      %v779 = vrcp.pop %v763
      %v780 = vmul.f32 1.0, %v779
      %v781 = vrcp.pop %v764
      %v782 = vmul.f32 1.0, %v781
      %v783 = vrcp.pop %v765
      %v784 = vmul.f32 1.0, %v783
      %v785 = vrcp.pop %v766
      %v786 = vmul.f32 1.0, %v785
      %v787 = vrcp.pop %v767
      %v788 = vmul.f32 1.0, %v787
      %v789 = vrcp.pop %v768
      %v790 = vmul.f32 1.0, %v789
      %v791 = vrcp.pop %v769
      %v792 = vmul.f32 1.0, %v791
      %v793 = vrcp.pop %v770
      %v794 = vmul.f32 1.0, %v793
      %v795 = vrcp.pop %v771
      %v796 = vmul.f32 1.0, %v795
      %v797 = vrcp.pop %v772
      %v798 = vmul.f32 1.0, %v797
      %v799 = vrcp.pop %v773
      %v800 = vmul.f32 1.0, %v799
      %v801 = vrcp.pop %v774
      %v802 = vmul.f32 1.0, %v801
      %v803 = vrcp.pop %v775
      %v804 = vmul.f32 1.0, %v803
      %v805 = vrcp.pop %v776
      %v806 = vmul.f32 1.0, %v805
      %v807 = vrcp.pop %v777
      %v808 = vmul.f32 1.0, %v807
      %v809 = vrcp.pop %v778
      %v810 = vmul.f32 1.0, %v809
      %vm811 = vcmask 64512
      %812 = vst.msk [vmem:[%s369] sm:$0xff] %vm811, %v780
      %813 = vst.msk [vmem:[%s369 + $0x8] sm:$0xff] %vm811, %v782
      %814 = vst.msk [vmem:[%s369 + $0x10] sm:$0xff] %vm811, %v784
      %815 = vst.msk [vmem:[%s369 + $0x18] sm:$0xff] %vm811, %v786
      %816 = vst.msk [vmem:[%s369 + $0x20] sm:$0xff] %vm811, %v788
      %817 = vst.msk [vmem:[%s369 + $0x28] sm:$0xff] %vm811, %v790
      %818 = vst.msk [vmem:[%s369 + $0x30] sm:$0xff] %vm811, %v792
      %819 = vst.msk [vmem:[%s369 + $0x38] sm:$0xff] %vm811, %v794
      %820 = vst.msk [vmem:[%s369 + $0x40] sm:$0xff] %vm811, %v796
      %821 = vst.msk [vmem:[%s369 + $0x48] sm:$0xff] %vm811, %v798
      %822 = vst.msk [vmem:[%s369 + $0x50] sm:$0xff] %vm811, %v800
      %823 = vst.msk [vmem:[%s369 + $0x58] sm:$0xff] %vm811, %v802
      %824 = vst.msk [vmem:[%s369 + $0x60] sm:$0xff] %vm811, %v804
      %825 = vst.msk [vmem:[%s369 + $0x68] sm:$0xff] %vm811, %v806
      %826 = vst.msk [vmem:[%s369 + $0x70] sm:$0xff] %vm811, %v808
      %827 = vst.msk [vmem:[%s369 + $0x78] sm:$0xff] %vm811, %v810
      %v828 = vld [vmem:[%s5] sm:$0xf]
      %v829 = vld [vmem:[%s5 + $0x4] sm:$0xf]
      %v830 = vld [vmem:[%s5 + $0x8] sm:$0xf]
      %v831 = vld [vmem:[%s5 + $0xc] sm:$0xf]
      %v832 = vld [vmem:[%s6] sm:$0x1]
      %v834 = vlaneseq
      %v835 = vshrl.u32 %v834, 7
      %v836 = vsub.s32 0, %v835
      %v837 = vrot.slane %v832, %v836
      %v843 = vunpack.c.l.b16 %v828
      %v844 = vunpack.c.l.b16 %v829
      %v845 = vunpack.c.l.b16 %v830
      %v846 = vunpack.c.l.b16 %v831
      %v847 = vpack.c.b16 %v844, %v843
      %v848 = vpack.c.b16 %v846, %v845
      %851 = vmatprep.subr.bf16.mxu0 0
      %852 = vmatpush1.bf16.msra.mxu0 %v847
      %853 = vmatprep.subr.bf16.mxu0 0
      %854 = vmatpush1.bf16.msra.mxu0 %v848
      %855 = vmatprep.subr.bf16.mxu0 0
      %856 = vmatpush1.bf16.msra.mxu0 0
      %857 = vmatprep.subr.bf16.mxu0 0
      %858 = vmatpush1.bf16.msra.mxu0 0
      %859 = vmatprep.subr.bf16.mxu0 0
      %860 = vmatpush1.bf16.msra.mxu0 0
      %861 = vmatprep.subr.bf16.mxu0 0
      %862 = vmatpush1.bf16.msra.mxu0 0
      %863 = vmatprep.subr.bf16.mxu0 0
      %864 = vmatpush1.bf16.msra.mxu0 0
      %865 = vmatprep.subr.bf16.mxu0 0
      %866 = vmatpush1.bf16.msra.mxu0 0
      %867 = vmatprep.subr.bf16.mxu0 0
      %868 = vmatpush1.bf16.msra.mxu0 0
      %869 = vmatprep.subr.bf16.mxu0 0
      %870 = vmatpush1.bf16.msra.mxu0 0
      %871 = vmatprep.subr.bf16.mxu0 0
      %872 = vmatpush1.bf16.msra.mxu0 0
      %873 = vmatprep.subr.bf16.mxu0 0
      %874 = vmatpush1.bf16.msra.mxu0 0
      %875 = vmatprep.subr.bf16.mxu0 0
      %876 = vmatpush1.bf16.msra.mxu0 0
      %877 = vmatprep.subr.bf16.mxu0 0
      %878 = vmatpush1.bf16.msra.mxu0 0
      %879 = vmatprep.subr.bf16.mxu0 0
      %880 = vmatpush1.bf16.msra.mxu0 0
      %881 = vmatprep.subr.bf16.mxu0 0
      %882 = vmatpush1.bf16.msra.mxu0 0
      %883 = vmatprep.mubr.bf16.mxu0 0
      %884 = vmatmul.mubr.bf16.gmra.mrb[0].mxu0 %v427
      %v885 = vpop.f32.mrb[0].mxu0
      %v886 = vadd.f32 %v837, %v885
      %v887 = vpop.f32.mrb[0].mxu0
      %v888 = vpop.f32.mrb[0].mxu0
      %v889 = vadd.f32 %v837, %v888
      %v890 = vpop.f32.mrb[0].mxu0
      %891 = vmatprep.mubr.bf16.mxu0 0
      %892 = vmatmul.mubr.bf16.gmra.mrb[0].mxu0 %v430
      %v893 = vpop.f32.mrb[0].mxu0
      %v894 = vadd.f32 %v837, %v893
      %v895 = vpop.f32.mrb[0].mxu0
      %v896 = vpop.f32.mrb[0].mxu0
      %v897 = vadd.f32 %v837, %v896
      %v898 = vpop.f32.mrb[0].mxu0
      %899 = vmatprep.mubr.bf16.mxu0 0
      %900 = vmatmul.mubr.bf16.gmra.mrb[0].mxu0 %v433
      %v901 = vpop.f32.mrb[0].mxu0
      %v902 = vadd.f32 %v837, %v901
      %v903 = vpop.f32.mrb[0].mxu0
      %v904 = vpop.f32.mrb[0].mxu0
      %v905 = vadd.f32 %v837, %v904
      %v906 = vpop.f32.mrb[0].mxu0
      %907 = vmatprep.mubr.bf16.mxu0 0
      %908 = vmatmul.mubr.bf16.gmra.mrb[0].mxu0 %v436
      %v909 = vpop.f32.mrb[0].mxu0
      %v910 = vadd.f32 %v837, %v909
      %v911 = vpop.f32.mrb[0].mxu0
      %v912 = vpop.f32.mrb[0].mxu0
      %v913 = vadd.f32 %v837, %v912
      %v914 = vpop.f32.mrb[0].mxu0
      %915 = vmatprep.mubr.bf16.mxu0 0
      %916 = vmatmul.mubr.bf16.gmra.mrb[0].mxu0 %v439
      %v917 = vpop.f32.mrb[0].mxu0
      %v918 = vadd.f32 %v837, %v917
      %v919 = vpop.f32.mrb[0].mxu0
      %v920 = vpop.f32.mrb[0].mxu0
      %v921 = vadd.f32 %v837, %v920
      %v922 = vpop.f32.mrb[0].mxu0
      %923 = vmatprep.mubr.bf16.mxu0 0
      %924 = vmatmul.mubr.bf16.gmra.mrb[0].mxu0 %v442
      %v925 = vpop.f32.mrb[0].mxu0
      %v926 = vadd.f32 %v837, %v925
      %v927 = vpop.f32.mrb[0].mxu0
      %v928 = vpop.f32.mrb[0].mxu0
      %v929 = vadd.f32 %v837, %v928
      %v930 = vpop.f32.mrb[0].mxu0
      %931 = vmatprep.mubr.bf16.mxu0 0
      %932 = vmatmul.mubr.bf16.gmra.mrb[0].mxu0 %v445
      %v933 = vpop.f32.mrb[0].mxu0
      %v934 = vadd.f32 %v837, %v933
      %v935 = vpop.f32.mrb[0].mxu0
      %v936 = vpop.f32.mrb[0].mxu0
      %v937 = vadd.f32 %v837, %v936
      %v938 = vpop.f32.mrb[0].mxu0
      %939 = vmatprep.mubr.bf16.mxu0 0
      %940 = vmatmul.mubr.bf16.gmra.mrb[0].mxu0 %v448
      %v941 = vpop.f32.mrb[0].mxu0
      %v942 = vadd.f32 %v837, %v941
      %v943 = vpop.f32.mrb[0].mxu0
      %v944 = vpop.f32.mrb[0].mxu0
      %v945 = vadd.f32 %v837, %v944
      %v946 = vpop.f32.mrb[0].mxu0
      %947 = vdwg.mxu0
      %v948 = vmax.f32 %v886, 0.0
      %v949 = vmax.f32 %v889, 0.0
      %v950 = vmax.f32 %v894, 0.0
      %v951 = vmax.f32 %v897, 0.0
      %v952 = vmax.f32 %v902, 0.0
      %v953 = vmax.f32 %v905, 0.0
      %v954 = vmax.f32 %v910, 0.0
      %v955 = vmax.f32 %v913, 0.0
      %v956 = vmax.f32 %v918, 0.0
      %v957 = vmax.f32 %v921, 0.0
      %v958 = vmax.f32 %v926, 0.0
      %v959 = vmax.f32 %v929, 0.0
      %v960 = vmax.f32 %v934, 0.0
      %v961 = vmax.f32 %v937, 0.0
      %v962 = vmax.f32 %v942, 0.0
      %v963 = vmax.f32 %v945, 0.0
      %v964 = vpack.c.bf16 %v949, %v948
      %v965 = vpack.c.bf16 %v951, %v950
      %v966 = vpack.c.bf16 %v953, %v952
      %v967 = vpack.c.bf16 %v955, %v954
      %v968 = vpack.c.bf16 %v957, %v956
      %v969 = vpack.c.bf16 %v959, %v958
      %v970 = vpack.c.bf16 %v961, %v960
      %v971 = vpack.c.bf16 %v963, %v962
      %v972 = vld [vmem:[%s7] sm:$0xf]
      %v973 = vld [vmem:[%s7 + $0x4] sm:$0xf]
      %v974 = vld [vmem:[%s7 + $0x8] sm:$0xf]
      %v975 = vld [vmem:[%s7 + $0xc] sm:$0xf]
      %v976 = vld [vmem:[%s8] sm:$0x1]
      %v978 = vlaneseq
      %v979 = vshrl.u32 %v978, 7
      %v980 = vsub.s32 0, %v979
      %v981 = vrot.slane %v976, %v980
      %v987 = vunpack.c.l.b16 %v972
      %v988 = vunpack.c.l.b16 %v973
      %v989 = vunpack.c.l.b16 %v974
      %v990 = vunpack.c.l.b16 %v975
      %v991 = vpack.c.b16 %v988, %v987
      %v992 = vpack.c.b16 %v990, %v989
      %v996 = vsel %vm425, %v964, 0
      %v999 = vsel %vm425, %v965, 0
      %v1002 = vsel %vm425, %v966, 0
      %v1005 = vsel %vm425, %v967, 0
      %v1008 = vsel %vm425, %v968, 0
      %v1011 = vsel %vm425, %v969, 0
      %v1014 = vsel %vm425, %v970, 0
      %v1017 = vsel %vm425, %v971, 0
      %1019 = vmatprep.subr.bf16.mxu0 0
      %1020 = vmatpush1.bf16.msra.mxu0 %v991
      %1021 = vmatprep.subr.bf16.mxu0 0
      %1022 = vmatpush1.bf16.msra.mxu0 %v992
      %1023 = vmatprep.subr.bf16.mxu0 0
      %1024 = vmatpush1.bf16.msra.mxu0 0
      %1025 = vmatprep.subr.bf16.mxu0 0
      %1026 = vmatpush1.bf16.msra.mxu0 0
      %1027 = vmatprep.subr.bf16.mxu0 0
      %1028 = vmatpush1.bf16.msra.mxu0 0
      %1029 = vmatprep.subr.bf16.mxu0 0
      %1030 = vmatpush1.bf16.msra.mxu0 0
      %1031 = vmatprep.subr.bf16.mxu0 0
      %1032 = vmatpush1.bf16.msra.mxu0 0
      %1033 = vmatprep.subr.bf16.mxu0 0
      %1034 = vmatpush1.bf16.msra.mxu0 0
      %1035 = vmatprep.subr.bf16.mxu0 0
      %1036 = vmatpush1.bf16.msra.mxu0 0
      %1037 = vmatprep.subr.bf16.mxu0 0
      %1038 = vmatpush1.bf16.msra.mxu0 0
      %1039 = vmatprep.subr.bf16.mxu0 0
      %1040 = vmatpush1.bf16.msra.mxu0 0
      %1041 = vmatprep.subr.bf16.mxu0 0
      %1042 = vmatpush1.bf16.msra.mxu0 0
      %1043 = vmatprep.subr.bf16.mxu0 0
      %1044 = vmatpush1.bf16.msra.mxu0 0
      %1045 = vmatprep.subr.bf16.mxu0 0
      %1046 = vmatpush1.bf16.msra.mxu0 0
      %1047 = vmatprep.subr.bf16.mxu0 0
      %1048 = vmatpush1.bf16.msra.mxu0 0
      %1049 = vmatprep.subr.bf16.mxu0 0
      %1050 = vmatpush1.bf16.msra.mxu0 0
      %1051 = vmatprep.mubr.bf16.mxu0 0
      %1052 = vmatmul.mubr.bf16.gmra.mrb[0].mxu0 %v996
      %v1053 = vpop.f32.mrb[0].mxu0
      %v1054 = vadd.f32 %v981, %v1053
      %v1055 = vpop.f32.mrb[0].mxu0
      %v1056 = vpop.f32.mrb[0].mxu0
      %v1057 = vadd.f32 %v981, %v1056
      %v1058 = vpop.f32.mrb[0].mxu0
      %1059 = vmatprep.mubr.bf16.mxu0 0
      %1060 = vmatmul.mubr.bf16.gmra.mrb[0].mxu0 %v999
      %v1061 = vpop.f32.mrb[0].mxu0
      %v1062 = vadd.f32 %v981, %v1061
      %v1063 = vpop.f32.mrb[0].mxu0
      %v1064 = vpop.f32.mrb[0].mxu0
      %v1065 = vadd.f32 %v981, %v1064
      %v1066 = vpop.f32.mrb[0].mxu0
      %1067 = vmatprep.mubr.bf16.mxu0 0
      %1068 = vmatmul.mubr.bf16.gmra.mrb[0].mxu0 %v1002
      %v1069 = vpop.f32.mrb[0].mxu0
      %v1070 = vadd.f32 %v981, %v1069
      %v1071 = vpop.f32.mrb[0].mxu0
      %v1072 = vpop.f32.mrb[0].mxu0
      %v1073 = vadd.f32 %v981, %v1072
      %v1074 = vpop.f32.mrb[0].mxu0
      %1075 = vmatprep.mubr.bf16.mxu0 0
      %1076 = vmatmul.mubr.bf16.gmra.mrb[0].mxu0 %v1005
      %v1077 = vpop.f32.mrb[0].mxu0
      %v1078 = vadd.f32 %v981, %v1077
      %v1079 = vpop.f32.mrb[0].mxu0
      %v1080 = vpop.f32.mrb[0].mxu0
      %v1081 = vadd.f32 %v981, %v1080
      %v1082 = vpop.f32.mrb[0].mxu0
      %1083 = vmatprep.mubr.bf16.mxu0 0
      %1084 = vmatmul.mubr.bf16.gmra.mrb[0].mxu0 %v1008
      %v1085 = vpop.f32.mrb[0].mxu0
      %v1086 = vadd.f32 %v981, %v1085
      %v1087 = vpop.f32.mrb[0].mxu0
      %v1088 = vpop.f32.mrb[0].mxu0
      %v1089 = vadd.f32 %v981, %v1088
      %v1090 = vpop.f32.mrb[0].mxu0
      %1091 = vmatprep.mubr.bf16.mxu0 0
      %1092 = vmatmul.mubr.bf16.gmra.mrb[0].mxu0 %v1011
      %v1093 = vpop.f32.mrb[0].mxu0
      %v1094 = vadd.f32 %v981, %v1093
      %v1095 = vpop.f32.mrb[0].mxu0
      %v1096 = vpop.f32.mrb[0].mxu0
      %v1097 = vadd.f32 %v981, %v1096
      %v1098 = vpop.f32.mrb[0].mxu0
      %1099 = vmatprep.mubr.bf16.mxu0 0
      %1100 = vmatmul.mubr.bf16.gmra.mrb[0].mxu0 %v1014
      %v1101 = vpop.f32.mrb[0].mxu0
      %v1102 = vadd.f32 %v981, %v1101
      %v1103 = vpop.f32.mrb[0].mxu0
      %v1104 = vpop.f32.mrb[0].mxu0
      %v1105 = vadd.f32 %v981, %v1104
      %v1106 = vpop.f32.mrb[0].mxu0
      %1107 = vmatprep.mubr.bf16.mxu0 0
      %1108 = vmatmul.mubr.bf16.gmra.mrb[0].mxu0 %v1017
      %v1109 = vpop.f32.mrb[0].mxu0
      %v1110 = vadd.f32 %v981, %v1109
      %v1111 = vpop.f32.mrb[0].mxu0
      %v1112 = vpop.f32.mrb[0].mxu0
      %v1113 = vadd.f32 %v981, %v1112
      %v1114 = vpop.f32.mrb[0].mxu0
      %1115 = vdwg.mxu0
      %v1116 = vxor.u32 %v1054, 2147483648
      %v1117 = vxor.u32 %v1057, 2147483648
      %v1118 = vxor.u32 %v1062, 2147483648
      %v1119 = vxor.u32 %v1065, 2147483648
      %v1120 = vxor.u32 %v1070, 2147483648
      %v1121 = vxor.u32 %v1073, 2147483648
      %v1122 = vxor.u32 %v1078, 2147483648
      %v1123 = vxor.u32 %v1081, 2147483648
      %v1124 = vxor.u32 %v1086, 2147483648
      %v1125 = vxor.u32 %v1089, 2147483648
      %v1126 = vxor.u32 %v1094, 2147483648
      %v1127 = vxor.u32 %v1097, 2147483648
      %v1128 = vxor.u32 %v1102, 2147483648
      %v1129 = vxor.u32 %v1105, 2147483648
      %v1130 = vxor.u32 %v1110, 2147483648
      %v1131 = vxor.u32 %v1113, 2147483648
      %v1132 = vmul.f32 %v1116, 1.442695
      %v1133 = vpow.pop %v1132
      %v1134 = vmul.f32 %v1117, 1.442695
      %v1135 = vpow.pop %v1134
      %v1136 = vmul.f32 %v1118, 1.442695
      %v1137 = vpow.pop %v1136
      %v1138 = vmul.f32 %v1119, 1.442695
      %v1139 = vpow.pop %v1138
      %v1140 = vmul.f32 %v1120, 1.442695
      %v1141 = vpow.pop %v1140
      %v1142 = vmul.f32 %v1121, 1.442695
      %v1143 = vpow.pop %v1142
      %v1144 = vmul.f32 %v1122, 1.442695
      %v1145 = vpow.pop %v1144
      %v1146 = vmul.f32 %v1123, 1.442695
      %v1147 = vpow.pop %v1146
      %v1148 = vmul.f32 %v1124, 1.442695
      %v1149 = vpow.pop %v1148
      %v1150 = vmul.f32 %v1125, 1.442695
      %v1151 = vpow.pop %v1150
      %v1152 = vmul.f32 %v1126, 1.442695
      %v1153 = vpow.pop %v1152
      %v1154 = vmul.f32 %v1127, 1.442695
      %v1155 = vpow.pop %v1154
      %v1156 = vmul.f32 %v1128, 1.442695
      %v1157 = vpow.pop %v1156
      %v1158 = vmul.f32 %v1129, 1.442695
      %v1159 = vpow.pop %v1158
      %v1160 = vmul.f32 %v1130, 1.442695
      %v1161 = vpow.pop %v1160
      %v1162 = vmul.f32 %v1131, 1.442695
      %v1163 = vpow.pop %v1162
      %v1164 = vadd.f32 %v1133, 1.0
      %v1165 = vadd.f32 %v1135, 1.0
      %v1166 = vadd.f32 %v1137, 1.0
      %v1167 = vadd.f32 %v1139, 1.0
      %v1168 = vadd.f32 %v1141, 1.0
      %v1169 = vadd.f32 %v1143, 1.0
      %v1170 = vadd.f32 %v1145, 1.0
      %v1171 = vadd.f32 %v1147, 1.0
      %v1172 = vadd.f32 %v1149, 1.0
      %v1173 = vadd.f32 %v1151, 1.0
      %v1174 = vadd.f32 %v1153, 1.0
      %v1175 = vadd.f32 %v1155, 1.0
      %v1176 = vadd.f32 %v1157, 1.0
      %v1177 = vadd.f32 %v1159, 1.0
      %v1178 = vadd.f32 %v1161, 1.0
      %v1179 = vadd.f32 %v1163, 1.0
      %v1180 = vrcp.pop %v1164
      %v1181 = vmul.f32 1.0, %v1180
      %v1182 = vrcp.pop %v1165
      %v1183 = vmul.f32 1.0, %v1182
      %v1184 = vrcp.pop %v1166
      %v1185 = vmul.f32 1.0, %v1184
      %v1186 = vrcp.pop %v1167
      %v1187 = vmul.f32 1.0, %v1186
      %v1188 = vrcp.pop %v1168
      %v1189 = vmul.f32 1.0, %v1188
      %v1190 = vrcp.pop %v1169
      %v1191 = vmul.f32 1.0, %v1190
      %v1192 = vrcp.pop %v1170
      %v1193 = vmul.f32 1.0, %v1192
      %v1194 = vrcp.pop %v1171
      %v1195 = vmul.f32 1.0, %v1194
      %v1196 = vrcp.pop %v1172
      %v1197 = vmul.f32 1.0, %v1196
      %v1198 = vrcp.pop %v1173
      %v1199 = vmul.f32 1.0, %v1198
      %v1200 = vrcp.pop %v1174
      %v1201 = vmul.f32 1.0, %v1200
      %v1202 = vrcp.pop %v1175
      %v1203 = vmul.f32 1.0, %v1202
      %v1204 = vrcp.pop %v1176
      %v1205 = vmul.f32 1.0, %v1204
      %v1206 = vrcp.pop %v1177
      %v1207 = vmul.f32 1.0, %v1206
      %v1208 = vrcp.pop %v1178
      %v1209 = vmul.f32 1.0, %v1208
      %v1210 = vrcp.pop %v1179
      %v1211 = vmul.f32 1.0, %v1210
      %vm1212 = vcmask 130048
      %1213 = vst.msk [vmem:[%s375] sm:$0xff] %vm1212, %v1181
      %1214 = vst.msk [vmem:[%s375 + $0x8] sm:$0xff] %vm1212, %v1183
      %1215 = vst.msk [vmem:[%s375 + $0x10] sm:$0xff] %vm1212, %v1185
      %1216 = vst.msk [vmem:[%s375 + $0x18] sm:$0xff] %vm1212, %v1187
      %1217 = vst.msk [vmem:[%s375 + $0x20] sm:$0xff] %vm1212, %v1189
      %1218 = vst.msk [vmem:[%s375 + $0x28] sm:$0xff] %vm1212, %v1191
      %1219 = vst.msk [vmem:[%s375 + $0x30] sm:$0xff] %vm1212, %v1193
      %1220 = vst.msk [vmem:[%s375 + $0x38] sm:$0xff] %vm1212, %v1195
      %1221 = vst.msk [vmem:[%s375 + $0x40] sm:$0xff] %vm1212, %v1197
      %1222 = vst.msk [vmem:[%s375 + $0x48] sm:$0xff] %vm1212, %v1199
      %1223 = vst.msk [vmem:[%s375 + $0x50] sm:$0xff] %vm1212, %v1201
      %1224 = vst.msk [vmem:[%s375 + $0x58] sm:$0xff] %vm1212, %v1203
      %1225 = vst.msk [vmem:[%s375 + $0x60] sm:$0xff] %vm1212, %v1205
      %1226 = vst.msk [vmem:[%s375 + $0x68] sm:$0xff] %vm1212, %v1207
      %1227 = vst.msk [vmem:[%s375 + $0x70] sm:$0xff] %vm1212, %v1209
      %1228 = vst.msk [vmem:[%s375 + $0x78] sm:$0xff] %vm1212, %v1211
      %s1229 = smul.u32 16, %s22
      %p1230 = scmp.lt.s32.totalorder %s1229, 31
      %s1231 = scalar_select %p1230, %s1229, 31
      %s1232 = smul.addr %s1231, 8
      %s1233 = scalar_lea.vmem %s9, %s1232
      %s1234 = smul.u32 16, %s22
      %p1235 = scmp.lt.s32.totalorder %s1234, 31
      %s1236 = scalar_select %p1235, %s1234, 31
      %s1237 = smul.addr %s1236, 8
      %s1238 = scalar_lea.vmem %s10, %s1237
      // Predicated region
      $region57: #{tpu_custom_call.1} parent=55 // pred_check
        %p1239 = pneg %p234
      $region58: #{tpu_custom_call.1} parent=55 // pred_check_branch
        %1241 = sbr.rel (%p1239) target = $region60
      $region59: #{tpu_custom_call.1} parent=55 // pred_region
        %s1242 = smul.u32 16, %s22
      $region60: #{tpu_custom_call.1} parent=55 // pred_fallthru
        _
      // Predicated region
      $region61: #{tpu_custom_call.1} parent=55 // pred_check
        %p1243 = pneg %p260
      $region62: #{tpu_custom_call.1} parent=55 // pred_check_branch
        %1245 = sbr.rel (%p1243) target = $region64
      $region63: #{tpu_custom_call.1} parent=55 // pred_region
        %s1246 = smul.u32 16, %s22
      $region64: #{tpu_custom_call.1} parent=55 // pred_fallthru
        _
    $region56: #{tpu_custom_call.1} parent=5 // pred_fallthru
      _
    %p1247 = scmp.le.s32.totalorder 2, %s17
    // Predicated region
    $region65: #{tpu_custom_call.1} parent=5 // pred_check
      %p1248 = pneg %p1247
    $region66: #{tpu_custom_call.1} parent=5 // pred_check_branch
      %1250 = sbr.rel (%p1248) target = $region68
    $region67: #{tpu_custom_call.1} parent=5 // pred_region
      %s1251 = ssub.s32 %s17, 2
      // Predicated region
      $region69: #{tpu_custom_call.1} parent=67 // pred_check
        %p1252 = pneg %p240
      $region70: #{tpu_custom_call.1} parent=67 // pred_check_branch
        %1254 = sbr.rel (%p1252) target = $region72
      $region71: #{tpu_custom_call.1} parent=67 // pred_region
        %s1255 = smul.u32 16, %s23
        %p1256 = scmp.lt.s32.totalorder %s1255, 31
        %s1257 = scalar_select %p1256, %s1255, 31
        %s1258 = smul.addr %s1257, 8
        %s1259 = scalar_lea.vmem %s9, %s1258
      $region72: #{tpu_custom_call.1} parent=67 // pred_fallthru
        _
      // Predicated region
      $region73: #{tpu_custom_call.1} parent=67 // pred_check
        %p1260 = pneg %p266
      $region74: #{tpu_custom_call.1} parent=67 // pred_check_branch
        %1262 = sbr.rel (%p1260) target = $region76
      $region75: #{tpu_custom_call.1} parent=67 // pred_region
        %s1263 = smul.u32 16, %s23
        %p1264 = scmp.lt.s32.totalorder %s1263, 31
        %s1265 = scalar_select %p1264, %s1263, 31
        %s1266 = smul.addr %s1265, 8
        %s1267 = scalar_lea.vmem %s10, %s1266
      $region76: #{tpu_custom_call.1} parent=67 // pred_fallthru
        _
    $region68: #{tpu_custom_call.1} parent=5 // pred_fallthru
      _
  $region6: #{tpu_custom_call.1} parent=0 // loop_footer
    %s21 = sadd.s32 1, %s17
  $region7: #{tpu_custom_call.1} parent=0 // loop_footer_branch
    %16 = sbr.rel target = $region3
  $region8: #{tpu_custom_call.1} parent=0 // loop_exit
    _

</llo_original>
